<compile_context>
chip_gen: v7x
topology: tpu7x:2x2x1
jax: 0.10.0
libtpu: 0.0.40
codegen_flags: <defaults>
</compile_context>

<pallas_src>
import math
import functools

import jax
import jax.numpy as jnp
from jax.experimental import pallas as pl
from jax.experimental.pallas import tpu as pltpu

INIT_SIGMA = 0.5        # default sigma_0 used by NoisyNet implementations
FACTORIZED = True       # module default: factorized Gaussian noise


# ---------------------------------------------------------------------------
# Kernel
# ---------------------------------------------------------------------------
def _noisy_linear_kernel(x_ref, xn_ref, wt_ref, st_ref, eps_out_ref, beff_ref,
                         o_ref, acc_w_ref, acc_s_ref):
    """One (tm, tn) output tile, accumulated over the K grid axis.

    x_ref:       (tm, tk)  input tile                     (compute_dtype)
    xn_ref:      (tm, tk)  (x * f(eps_in)) tile            (compute_dtype)
    wt_ref:      (tk, tn)  weight^T tile                   (compute_dtype)
    st_ref:      (tk, tn)  noisy_weight^T tile             (compute_dtype)
    eps_out_ref: (1, tn)   f(out_noise) tile               (f32)
    beff_ref:    (1, tn)   bias + noisy_bias*f(out_noise)  (f32)
    o_ref:       (tm, tn)  output tile (written on last K step)
    acc_w_ref:   (tm, tn)  f32 accumulator for x @ W^T
    acc_s_ref:   (tm, tn)  f32 accumulator for (x*eps_in) @ sigma^T
    """
    k = pl.program_id(2)

    @pl.when(k == 0)
    def _init():
        acc_w_ref[...] = jnp.zeros_like(acc_w_ref)
        acc_s_ref[...] = jnp.zeros_like(acc_s_ref)

    acc_w_ref[...] += jnp.dot(x_ref[...], wt_ref[...],
                              preferred_element_type=jnp.float32)
    acc_s_ref[...] += jnp.dot(xn_ref[...], st_ref[...],
                              preferred_element_type=jnp.float32)

    @pl.when(k == pl.num_programs(2) - 1)
    def _finalize():
        # eps_out scaling and bias applied exactly once per output tile.
        o_ref[...] = (acc_w_ref[...]
                      + eps_out_ref[...] * acc_s_ref[...]
                      + beff_ref[...]).astype(o_ref.dtype)


# ---------------------------------------------------------------------------
# Helpers
# ---------------------------------------------------------------------------
def _f_noise(e):
    # Factorized noise transform: f(e) = sign(e) * sqrt(|e|)
    return jnp.sign(e) * jnp.sqrt(jnp.abs(e))


def _round_up(x, m):
    return ((x + m - 1) // m) * m


def _pad2(a, rows, cols):
    pr, pc = rows - a.shape[0], cols - a.shape[1]
    if pr or pc:
        a = jnp.pad(a, ((0, pr), (0, pc)))
    return a


# ---------------------------------------------------------------------------
# One-time parameter packing (persistent layout; do NOT call per forward)
# ---------------------------------------------------------------------------
def pack_noisy_linear_params(weight, noisy_weight, bias=None, noisy_bias=None, *,
                             compute_dtype=jnp.bfloat16,
                             tn_max=512, tk_max=1024):
    """Transpose to (K, N), pad to tile multiples, cast to compute_dtype.

    compute_dtype=jnp.bfloat16 is the recommended production setting (halves
    weight-streaming HBM traffic on the MXU); pass jnp.float32 for exact
    training parity with the PyTorch module.
    Returns (arrays_dict, static_config_dict).
    """
    assert (bias is None) == (noisy_bias is None), \
        "bias and noisy_bias must both be present or both be None"
    N, K = weight.shape
    tn = min(tn_max, _round_up(N, 128))
    tk = min(tk_max, _round_up(K, 128))
    N_pad = _round_up(N, tn)
    K_pad = _round_up(K, tk)

    wt = _pad2(weight.T, K_pad, N_pad).astype(compute_dtype)       # (K_pad, N_pad)
    st = _pad2(noisy_weight.T, K_pad, N_pad).astype(compute_dtype)
    if bias is None:
        b_p = jnp.zeros((1, N_pad), jnp.float32)
        nb_p = jnp.zeros((1, N_pad), jnp.float32)
    else:
        b_p = _pad2(bias.reshape(1, N).astype(jnp.float32), 1, N_pad)
        nb_p = _pad2(noisy_bias.reshape(1, N).astype(jnp.float32), 1, N_pad)

    arrays = dict(wt=wt, st=st, bias=b_p, noisy_bias=nb_p)
    config = dict(n_in=K, n_out=N, tn=tn, tk=tk, compute_dtype=compute_dtype)
    return arrays, config


# ---------------------------------------------------------------------------
# Forward pass (per-call work is only O(M*K + N) glue plus the kernel)
# ---------------------------------------------------------------------------
@functools.partial(
    jax.jit,
    static_argnames=("n_out", "tn", "tk", "tm_max", "compute_dtype", "out_dtype"))
def noisy_linear_fwd(x, in_noise, out_noise, wt, st, bias_p, nbias_p, *,
                     n_out, tn, tk, tm_max=512,
                     compute_dtype=jnp.bfloat16, out_dtype=jnp.float32):
    """y = x @ W^T + f(eps_out) * ((x * f(eps_in)) @ sigma^T) + b_eff.

    x:          (B, in_features) activations
    in_noise:   (1, in_features) or (in_features,)  raw N(0,1) samples
    out_noise:  (out_features,) or (1, out_features) raw N(0,1) samples
    wt, st:     (K_pad, N_pad) pre-packed weight^T / noisy_weight^T
    bias_p, nbias_p: (1, N_pad) pre-packed f32 bias / noisy_bias (zeros if None)
    Returns (B, out_features) in out_dtype.
    """
    B, K = x.shape
    K_pad, N_pad = wt.shape
    N = n_out

    # --- tiny per-call glue (noise changes every forward, so this can't be
    # folded into the packed params) -----------------------------------------
    eps_in = _f_noise(in_noise).reshape(1, K).astype(jnp.float32)
    eps_out = _f_noise(out_noise).reshape(1, N).astype(jnp.float32)
    eps_out_p = _pad2(eps_out, 1, N_pad)
    b_eff = bias_p + nbias_p * eps_out_p                            # (1, N_pad) f32

    xn = x.astype(jnp.float32) * eps_in                             # (B, K)

    # --- M tiling (weights are streamed once per M block, so maximize tm) ---
    tm = min(tm_max, _round_up(B, 8))
    M_pad = _round_up(B, tm)
    # NOTE(v6e/v7x): when compute-bound at very large batch, tm multiples of
    # 256 match the 256x256 MXU better; minimizing the M grid matters more
    # for this HBM-bound layer, so we keep tm = round_up(B, 8) capped at tm_max.

    xp = _pad2(x, M_pad, K_pad).astype(compute_dtype)
    xnp = _pad2(xn, M_pad, K_pad).astype(compute_dtype)

    # --- make sure the parallel grid has >= 2 steps (v7x has 2 TensorCores
    # sharded over the parallel axes; a 1x1 parallel grid idles one core) ----
    grid_m = M_pad // tm
    grid_n = N_pad // tn
    while grid_m * grid_n < 2 and tn >= 256:
        tn //= 2
        grid_n = N_pad // tn

    grid = (grid_m, grid_n, K_pad // tk)

    # --- VMEM budget: double-buffered inputs + double-buffered output +
    # single-buffered accumulators, with headroom; clamp to 36 MiB so it stays
    # safe on v7x's 64 MiB physical VMEM (v5e/v6e have 128 MiB). -------------
    cbytes = jnp.dtype(compute_dtype).itemsize
    obytes = jnp.dtype(out_dtype).itemsize
    in_tile_bytes = 2 * tm * tk * cbytes + 2 * tk * tn * cbytes + 2 * tn * 4
    vmem_est = 2 * in_tile_bytes + 2 * tm * tn * obytes + 2 * tm * tn * 4
    vmem_limit = int(min(max(vmem_est + (2 << 20), 8 << 20), 36 << 20))

    # TODO(synk): if profiling shows exposed weight DMA at small batch, add
    # pipeline_mode=pl.Buffered(3) to the two weight BlockSpecs (sweep & keep
    # only if it measures).
    out = pl.pallas_call(
        _noisy_linear_kernel,
        out_shape=jax.ShapeDtypeStruct((M_pad, N_pad), out_dtype),
        grid_spec=pltpu.PrefetchScalarGridSpec(
            num_scalar_prefetch=0,
            grid=grid,
            in_specs=[
                pl.BlockSpec((tm, tk), lambda i, j, k: (i, k)),   # x
                pl.BlockSpec((tm, tk), lambda i, j, k: (i, k)),   # x * f(eps_in)
                pl.BlockSpec((tk, tn), lambda i, j, k: (k, j)),   # W^T
                pl.BlockSpec((tk, tn), lambda i, j, k: (k, j)),   # sigma^T
                pl.BlockSpec((1, tn), lambda i, j, k: (0, j)),    # f(eps_out)
                pl.BlockSpec((1, tn), lambda i, j, k: (0, j)),    # b_eff
            ],
            out_specs=pl.BlockSpec((tm, tn), lambda i, j, k: (i, j)),
            scratch_shapes=[pltpu.VMEM((tm, tn), jnp.float32),    # acc_w
                            pltpu.VMEM((tm, tn), jnp.float32)],   # acc_s
        ),
        compiler_params=pltpu.CompilerParams(
            dimension_semantics=("parallel", "parallel", "arbitrary"),
            vmem_limit_bytes=vmem_limit,
        ),
    )(xp, xnp, wt, st, eps_out_p, b_eff)

    return out[:B, :N]


def apply_noisy_linear(params, config, x, in_noise, out_noise, *,
                       tm_max=512, out_dtype=jnp.float32):
    """Convenience wrapper around noisy_linear_fwd for packed params."""
    return noisy_linear_fwd(
        x, in_noise, out_noise,
        params["wt"], params["st"], params["bias"], params["noisy_bias"],
        n_out=config["n_out"], tn=config["tn"], tk=config["tk"],
        tm_max=tm_max, compute_dtype=config["compute_dtype"],
        out_dtype=out_dtype)


# ---------------------------------------------------------------------------
# Parameter init (mirrors NoisyLinear.reset_parameters) and pure-JAX reference
# ---------------------------------------------------------------------------
def init_noisy_linear_params(key, in_features, out_features,
                             initial_sigma=INIT_SIGMA, factorized=FACTORIZED):
    kw, kb = jax.random.split(key)
    if factorized:
        sqrt_in = math.sqrt(in_features)
        bound = 1.0 / sqrt_in
        sigma_init = initial_sigma / sqrt_in
    else:
        bound = math.sqrt(3.0 / in_features)
        sigma_init = initial_sigma

    weight = jax.random.uniform(kw, (out_features, in_features),
                                jnp.float32, -bound, bound)
    noisy_weight = jnp.full((out_features, in_features), sigma_init, jnp.float32)
    bias = jax.random.uniform(kb, (out_features,), jnp.float32, -bound, bound)
    noisy_bias = jnp.full((out_features,), sigma_init, jnp.float32)
    return weight, noisy_weight, bias, noisy_bias


def reference_noisy_linear(x, weight, noisy_weight, bias, noisy_bias,
                           in_noise, out_noise):
    """Pure-JAX reference matching the PyTorch forward (factorized, noise=True)."""
    f = lambda e: jnp.sign(e) * jnp.sqrt(jnp.abs(e))
    eps_in = f(in_noise).reshape(1, -1)                 # (1, in)
    eps_out = f(out_noise).reshape(-1)                  # (out,)
    w_eff = weight + noisy_weight * (eps_out[:, None] * eps_in)
    b_eff = bias.reshape(-1) + noisy_bias.reshape(-1) * eps_out
    return x @ w_eff.T + b_eff[None, :]


# ---------------------------------------------------------------------------
# Demo / self-check
# ---------------------------------------------------------------------------
if __name__ == "__main__":
    # TODO(synk): noise sampling (torch.randn) is left in plain JAX; it could be
    # moved in-kernel with pltpu.prng_* but the PyTorch module samples per-forward
    # on the host side, so semantics are preserved this way.
    key = jax.random.PRNGKey(0)

    # ---- test 1: small shapes, f32 compute (exact parity), tight tolerance ----
    k_param, k_x, k_ni, k_no, key = jax.random.split(key, 5)
    B, IN, OUT = 8, 32, 32
    w, nw, b, nb = init_noisy_linear_params(k_param, IN, OUT)
    x = jax.random.normal(k_x, (B, IN), jnp.float32)
    in_noise = jax.random.normal(k_ni, (1, IN), jnp.float32)
    out_noise = jax.random.normal(k_no, (OUT,), jnp.float32)

    params_f32, cfg_f32 = pack_noisy_linear_params(w, nw, b, nb,
                                                   compute_dtype=jnp.float32)
    out = apply_noisy_linear(params_f32, cfg_f32, x, in_noise, out_noise)
    out = jax.block_until_ready(out)
    ref = reference_noisy_linear(x, w, nw, b, nb, in_noise, out_noise)
    assert out.shape == (B, OUT)
    assert jnp.allclose(out, ref, atol=1e-5, rtol=1e-5)

    # ---- test 2: awkward shapes, multi-step K/N grid (padding + accumulators) ----
    k_param, k_x, k_ni, k_no, key = jax.random.split(key, 5)
    B2, IN2, OUT2 = 6, 300, 200
    w2, nw2, b2, nb2 = init_noisy_linear_params(k_param, IN2, OUT2)
    x2 = jax.random.normal(k_x, (B2, IN2), jnp.float32)
    in_noise2 = jax.random.normal(k_ni, (1, IN2), jnp.float32)
    out_noise2 = jax.random.normal(k_no, (OUT2,), jnp.float32)

    params2, cfg2 = pack_noisy_linear_params(w2, nw2, b2, nb2,
                                             compute_dtype=jnp.float32,
                                             tn_max=128, tk_max=128)
    out2 = apply_noisy_linear(params2, cfg2, x2, in_noise2, out_noise2,
                              tm_max=8)                     # grid = (1, 2, 3)
    out2 = jax.block_until_ready(out2)
    ref2 = reference_noisy_linear(x2, w2, nw2, b2, nb2, in_noise2, out_noise2)
    assert out2.shape == (B2, OUT2)
    assert jnp.allclose(out2, ref2, atol=1e-4, rtol=1e-4)

    # ---- test 3: bf16 packed weights / activations (f32 accumulation) ----
    params_bf16, cfg_bf16 = pack_noisy_linear_params(w, nw, b, nb,
                                                     compute_dtype=jnp.bfloat16)
    out3 = apply_noisy_linear(params_bf16, cfg_bf16, x, in_noise, out_noise)
    out3 = jax.block_until_ready(out3)
    assert out3.shape == (B, OUT)
    assert jnp.allclose(out3, ref, atol=5e-2, rtol=5e-2)

    print("KERNEL_OK")
</pallas_src>

<mosaic_0001>
module attributes {stable_mosaic.version = 11 : i64} {
  func.func @_noisy_linear_kernel(%arg0: i32, %arg1: i32, %arg2: i32, %arg3: memref<8x128xf32, #tpu.memory_space<vmem>>, %arg4: memref<8x128xf32, #tpu.memory_space<vmem>>, %arg5: memref<128x128xf32, #tpu.memory_space<vmem>>, %arg6: memref<128x128xf32, #tpu.memory_space<vmem>>, %arg7: memref<1x128xf32, #tpu.memory_space<vmem>>, %arg8: memref<1x128xf32, #tpu.memory_space<vmem>>, %arg9: memref<8x128xf32, #tpu.memory_space<vmem>>, %arg10: memref<8x128xf32, #tpu.memory_space<vmem>>, %arg11: memref<8x128xf32, #tpu.memory_space<vmem>>) attributes {dimension_semantics = [#tpu.dimension_semantics<parallel>, #tpu.dimension_semantics<parallel>, #tpu.dimension_semantics<arbitrary>], iteration_bounds = array<i64: 1, 1, 1>, scalar_prefetch = 0 : i64, scratch_operands = 2 : i64, tpu.core_type = #tpu.core_type<tc>, window_params = [{transform_indices = @transform_0, window_bounds = array<i64: 8, 128>}, {transform_indices = @transform_1, window_bounds = array<i64: 8, 128>}, {transform_indices = @transform_2, window_bounds = array<i64: 128, 128>}, {transform_indices = @transform_3, window_bounds = array<i64: 128, 128>}, {transform_indices = @transform_4, window_bounds = array<i64: 1, 128>}, {transform_indices = @transform_5, window_bounds = array<i64: 1, 128>}, {transform_indices = @transform_6, window_bounds = array<i64: 8, 128>}]} {
    %c0_i32 = arith.constant 0 : i32
    %0 = arith.cmpi eq, %arg2, %c0_i32 : i32
    %1 = arith.extui %0 : i1 to i32
    %c0_i32_0 = arith.constant 0 : i32
    %2 = arith.cmpi ne, %1, %c0_i32_0 : i32
    scf.if %2 {
      %cst_19 = arith.constant 0.000000e+00 : f32
      %18 = vector.broadcast %cst_19 : f32 to vector<8x128xf32>
      %c0_20 = arith.constant 0 : index
      %c0_21 = arith.constant 0 : index
      %19 = vector.load %arg10[%c0_20, %c0_21] : memref<8x128xf32, #tpu.memory_space<vmem>>, vector<8x128xf32>
      tpu.vector_store %arg10[%c0_20, %c0_21], %18 {strides = array<i32>} : memref<8x128xf32, #tpu.memory_space<vmem>>, vector<8x128xf32>,
      %cst_22 = arith.constant 0.000000e+00 : f32
      %20 = vector.broadcast %cst_22 : f32 to vector<8x128xf32>
      %c0_23 = arith.constant 0 : index
      %c0_24 = arith.constant 0 : index
      %21 = vector.load %arg11[%c0_23, %c0_24] : memref<8x128xf32, #tpu.memory_space<vmem>>, vector<8x128xf32>
      tpu.vector_store %arg11[%c0_23, %c0_24], %20 {strides = array<i32>} : memref<8x128xf32, #tpu.memory_space<vmem>>, vector<8x128xf32>,
    } else {
    }
    %c0 = arith.constant 0 : index
    %c0_1 = arith.constant 0 : index
    %3 = vector.load %arg10[%c0, %c0_1] : memref<8x128xf32, #tpu.memory_space<vmem>>, vector<8x128xf32>
    %c0_2 = arith.constant 0 : index
    %c0_3 = arith.constant 0 : index
    %4 = vector.load %arg3[%c0_2, %c0_3] : memref<8x128xf32, #tpu.memory_space<vmem>>, vector<8x128xf32>
    %c0_4 = arith.constant 0 : index
    %c0_5 = arith.constant 0 : index
    %5 = vector.load %arg5[%c0_4, %c0_5] : memref<128x128xf32, #tpu.memory_space<vmem>>, vector<128x128xf32>
    %cst = arith.constant dense<0.000000e+00> : vector<8x128xf32>
    %6 = tpu.matmul %4, %5, %cst {dimension_numbers = #tpu.dot_dimension_numbers<[1], [0], [0], [1], [0, 0, 1, 1], [], []>} : vector<8x128xf32>, vector<128x128xf32>, vector<8x128xf32> -> vector<8x128xf32>
    %7 = arith.addf %3, %6 : vector<8x128xf32>
    %c0_6 = arith.constant 0 : index
    %c0_7 = arith.constant 0 : index
    %8 = vector.load %arg10[%c0_6, %c0_7] : memref<8x128xf32, #tpu.memory_space<vmem>>, vector<8x128xf32>
    tpu.vector_store %arg10[%c0_6, %c0_7], %7 {strides = array<i32>} : memref<8x128xf32, #tpu.memory_space<vmem>>, vector<8x128xf32>,
    %c0_8 = arith.constant 0 : index
    %c0_9 = arith.constant 0 : index
    %9 = vector.load %arg11[%c0_8, %c0_9] : memref<8x128xf32, #tpu.memory_space<vmem>>, vector<8x128xf32>
    %c0_10 = arith.constant 0 : index
    %c0_11 = arith.constant 0 : index
    %10 = vector.load %arg4[%c0_10, %c0_11] : memref<8x128xf32, #tpu.memory_space<vmem>>, vector<8x128xf32>
    %c0_12 = arith.constant 0 : index
    %c0_13 = arith.constant 0 : index
    %11 = vector.load %arg6[%c0_12, %c0_13] : memref<128x128xf32, #tpu.memory_space<vmem>>, vector<128x128xf32>
    %cst_14 = arith.constant dense<0.000000e+00> : vector<8x128xf32>
    %12 = tpu.matmul %10, %11, %cst_14 {dimension_numbers = #tpu.dot_dimension_numbers<[1], [0], [0], [1], [0, 0, 1, 1], [], []>} : vector<8x128xf32>, vector<128x128xf32>, vector<8x128xf32> -> vector<8x128xf32>
    %13 = arith.addf %9, %12 : vector<8x128xf32>
    %c0_15 = arith.constant 0 : index
    %c0_16 = arith.constant 0 : index
    %14 = vector.load %arg11[%c0_15, %c0_16] : memref<8x128xf32, #tpu.memory_space<vmem>>, vector<8x128xf32>
    tpu.vector_store %arg11[%c0_15, %c0_16], %13 {strides = array<i32>} : memref<8x128xf32, #tpu.memory_space<vmem>>, vector<8x128xf32>,
    %c0_i32_17 = arith.constant 0 : i32
    %15 = arith.cmpi eq, %arg2, %c0_i32_17 : i32
    %16 = arith.extui %15 : i1 to i32
    %c0_i32_18 = arith.constant 0 : i32
    %17 = arith.cmpi ne, %16, %c0_i32_18 : i32
    scf.if %17 {
      %c0_19 = arith.constant 0 : index
      %c0_20 = arith.constant 0 : index
      %18 = vector.load %arg10[%c0_19, %c0_20] : memref<8x128xf32, #tpu.memory_space<vmem>>, vector<8x128xf32>
      %c0_21 = arith.constant 0 : index
      %c0_22 = arith.constant 0 : index
      %19 = vector.load %arg7[%c0_21, %c0_22] : memref<1x128xf32, #tpu.memory_space<vmem>>, vector<1x128xf32>
      %c0_23 = arith.constant 0 : index
      %c0_24 = arith.constant 0 : index
      %20 = vector.load %arg11[%c0_23, %c0_24] : memref<8x128xf32, #tpu.memory_space<vmem>>, vector<8x128xf32>
      %21 = vector.broadcast %19 : vector<1x128xf32> to vector<8x128xf32>
      %22 = arith.mulf %21, %20 : vector<8x128xf32>
      %23 = arith.addf %18, %22 : vector<8x128xf32>
      %c0_25 = arith.constant 0 : index
      %c0_26 = arith.constant 0 : index
      %24 = vector.load %arg8[%c0_25, %c0_26] : memref<1x128xf32, #tpu.memory_space<vmem>>, vector<1x128xf32>
      %25 = vector.broadcast %24 : vector<1x128xf32> to vector<8x128xf32>
      %26 = arith.addf %23, %25 : vector<8x128xf32>
      %c0_27 = arith.constant 0 : index
      %c0_28 = arith.constant 0 : index
      %27 = vector.load %arg9[%c0_27, %c0_28] : memref<8x128xf32, #tpu.memory_space<vmem>>, vector<8x128xf32>
      tpu.vector_store %arg9[%c0_27, %c0_28], %26 {strides = array<i32>} : memref<8x128xf32, #tpu.memory_space<vmem>>, vector<8x128xf32>,
    } else {
    }
    return
  }
  func.func @transform_0(%arg0: i32, %arg1: i32, %arg2: i32) -> (i32, i32) {
    %c0_i32 = arith.constant 0 : i32
    return %arg0, %arg2 : i32, i32
  }
  func.func @transform_1(%arg0: i32, %arg1: i32, %arg2: i32) -> (i32, i32) {
    %c0_i32 = arith.constant 0 : i32
    return %arg0, %arg2 : i32, i32
  }
  func.func @transform_2(%arg0: i32, %arg1: i32, %arg2: i32) -> (i32, i32) {
    %c0_i32 = arith.constant 0 : i32
    return %arg2, %arg1 : i32, i32
  }
  func.func @transform_3(%arg0: i32, %arg1: i32, %arg2: i32) -> (i32, i32) {
    %c0_i32 = arith.constant 0 : i32
    return %arg2, %arg1 : i32, i32
  }
  func.func @transform_4(%arg0: i32, %arg1: i32, %arg2: i32) -> (i32, i32) {
    %c0_i32 = arith.constant 0 : i32
    %c0_i32_0 = arith.constant 0 : i32
    return %c0_i32, %arg1 : i32, i32
  }
  func.func @transform_5(%arg0: i32, %arg1: i32, %arg2: i32) -> (i32, i32) {
    %c0_i32 = arith.constant 0 : i32
    %c0_i32_0 = arith.constant 0 : i32
    return %c0_i32, %arg1 : i32, i32
  }
  func.func @transform_6(%arg0: i32, %arg1: i32, %arg2: i32) -> (i32, i32) {
    %c0_i32 = arith.constant 0 : i32
    return %arg0, %arg1 : i32, i32
  }
}

</mosaic_0001>

<llo_original>
// kernel: noisy_linear_fwd.1
$region0: #{noisy_linear_fwd.1}
  #allocation0 [shape = 'u32[]', space=smem, size = 0x4, offset = 0x4, fixed_abs, tag = 'smem constant byte address 0x4 - core index']
  #allocation1 [shape = 'u32[144,128]{1,0:T(1,128)}', space=vmem, size = 0x12000, scoped, tag = 'internal scratch']
  #allocation2 [shape = 'f32[8,128]{1,0:T(8,128)}', space=vmem, size = 0x1000, scoped, tag = 'scratch operand']
  #allocation3 [shape = 'f32[8,128]{1,0:T(8,128)}', space=vmem, size = 0x1000, scoped, tag = 'scratch operand']
  %s0 = inlined_call_operand.vmem [shape: f32[8,128], index: 0, kind: input, shape index: {}]
  %s1 = inlined_call_operand.vmem [shape: f32[8,128], index: 1, kind: input, shape index: {}]
  %s2 = inlined_call_operand.hbm [shape: f32[128,128], index: 2, kind: input, shape index: {}]
  %s3 = inlined_call_operand.hbm [shape: f32[128,128], index: 3, kind: input, shape index: {}]
  %s4 = inlined_call_operand.vmem [shape: f32[1,128], index: 4, kind: input, shape index: {}]
  %s5 = inlined_call_operand.vmem [shape: f32[1,128], index: 5, kind: input, shape index: {}]
  %s6 = inlined_call_operand.hbm [shape: f32[8,128], index: 6, kind: output, shape index: {}]
  %s7 = sld [smem:[#allocation0]]
  $region50: #{noisy_linear_fwd.1} parent=0
    _
  %s9 = ssub.s32 1, %s7
  %s10 = scalar_select 0, %s9, %s7
  $region1: #{noisy_linear_fwd.1} parent=0
    #allocation4 [shape = 'u8[65536]{0}', space=vmem, size = 0x10000, scoped, tag = 'input window, operand 2, single buffered']
    #allocation5 [shape = 's32[1]{0}', space=sflag, size = 0x4, scoped, tag = 'scoped memory for noisy_linear_fwd.1']
    #allocation6 [shape = 's32[1]{0}', space=sflag, size = 0x4, scoped, tag = 'scoped memory for noisy_linear_fwd.1']
    #allocation7 [shape = 'u8[65536]{0}', space=vmem, size = 0x10000, scoped, tag = 'input window, operand 3, single buffered']
    #allocation8 [shape = 's32[1]{0}', space=sflag, size = 0x4, scoped, tag = 'scoped memory for noisy_linear_fwd.1']
    #allocation9 [shape = 'u8[4096]{0}', space=vmem, size = 0x1000, scoped, tag = 'output window, operand 0, single buffered']
    %11 = vsyncpa [#allocation5], 0
    %12 = vsyncpa [#allocation8], 0
    %13 = vsyncpa [#allocation6], 0
    // Predicated region
    $region2: #{noisy_linear_fwd.1} parent=1 // pred_check
      _
    $region3: #{noisy_linear_fwd.1} parent=1 // pred_check_branch
      %15 = sbr.rel (0) target = $region5
    $region4: #{noisy_linear_fwd.1} parent=1 // pred_region
      _
    $region5: #{noisy_linear_fwd.1} parent=1 // pred_fallthru
      _
    // Predicated region
    $region6: #{noisy_linear_fwd.1} parent=1 // pred_check
      _
    $region7: #{noisy_linear_fwd.1} parent=1 // pred_check_branch
      %17 = sbr.rel (0) target = $region9
    $region8: #{noisy_linear_fwd.1} parent=1 // pred_region
      _
    $region9: #{noisy_linear_fwd.1} parent=1 // pred_fallthru
      _
    // Predicated region
    $region10: #{noisy_linear_fwd.1} parent=1 // pred_check
      _
    $region11: #{noisy_linear_fwd.1} parent=1 // pred_check_branch
      %19 = sbr.rel (0) target = $region13
    $region12: #{noisy_linear_fwd.1} parent=1 // pred_region
      %s21 = ssub.s32 2048, 2048
      %22 = vsyncadd [#allocation5], %s21
      %s23 = sshll.u32 [#allocation4], 4
      %s24 = int_to_ptr.vmem [resolvable:$true] %s23
      %29 = dma.hbm_to_vmem [thread:$0]  %s2, 2048, %s24, [#allocation5], 128, 128, 8
    $region13: #{noisy_linear_fwd.1} parent=1 // pred_fallthru
      _
    // Predicated region
    $region14: #{noisy_linear_fwd.1} parent=1 // pred_check
      _
    $region15: #{noisy_linear_fwd.1} parent=1 // pred_check_branch
      %31 = sbr.rel (0) target = $region17
    $region16: #{noisy_linear_fwd.1} parent=1 // pred_region
      %s33 = ssub.s32 2048, 2048
      %34 = vsyncadd [#allocation8], %s33
      %s35 = sshll.u32 [#allocation7], 4
      %s36 = int_to_ptr.vmem [resolvable:$true] %s35
      %41 = dma.hbm_to_vmem [thread:$0]  %s3, 2048, %s36, [#allocation8], 128, 128, 8
    $region17: #{noisy_linear_fwd.1} parent=1 // pred_fallthru
      _
    // Predicated region
    $region18: #{noisy_linear_fwd.1} parent=1 // pred_check
      _
    $region19: #{noisy_linear_fwd.1} parent=1 // pred_check_branch
      %43 = sbr.rel (0) target = $region21
    $region20: #{noisy_linear_fwd.1} parent=1 // pred_region
      _
    $region21: #{noisy_linear_fwd.1} parent=1 // pred_fallthru
      _
    // Predicated region
    $region22: #{noisy_linear_fwd.1} parent=1 // pred_check
      _
    $region23: #{noisy_linear_fwd.1} parent=1 // pred_check_branch
      %45 = sbr.rel (0) target = $region25
    $region24: #{noisy_linear_fwd.1} parent=1 // pred_region
      _
    $region25: #{noisy_linear_fwd.1} parent=1 // pred_fallthru
      _
    // Predicated region
    $region26: #{noisy_linear_fwd.1} parent=1 // pred_check
      _
    $region27: #{noisy_linear_fwd.1} parent=1 // pred_check_branch
      %47 = sbr.rel (0) target = $region29
    $region28: #{noisy_linear_fwd.1} parent=1 // pred_region
      %48 = dma.done [#allocation5], 2048
    $region29: #{noisy_linear_fwd.1} parent=1 // pred_fallthru
      _
    // Predicated region
    $region30: #{noisy_linear_fwd.1} parent=1 // pred_check
      _
    $region31: #{noisy_linear_fwd.1} parent=1 // pred_check_branch
      %50 = sbr.rel (0) target = $region33
    $region32: #{noisy_linear_fwd.1} parent=1 // pred_region
      %51 = dma.done [#allocation8], 2048
    $region33: #{noisy_linear_fwd.1} parent=1 // pred_fallthru
      _
    %p52 = scmp.eq.s32.totalorder 0, 0
    // Predicated region
    $region34: #{noisy_linear_fwd.1} parent=1 // pred_check
      %p53 = pneg %p52
    $region35: #{noisy_linear_fwd.1} parent=1 // pred_check_branch
      %55 = sbr.rel (%p53) target = $region37
    $region36: #{noisy_linear_fwd.1} parent=1 // pred_region
      %56 = vst [vmem:[#allocation2] sm:$0xff] 0.0
      %57 = vst [vmem:[#allocation3] sm:$0xff] 0.0
    $region37: #{noisy_linear_fwd.1} parent=1 // pred_fallthru
      _
    %v58 = vld [vmem:[#allocation2] sm:$0xff]
    %v59 = vld [vmem:[%s0] sm:$0xff]
    %v60 = vld [vmem:[#allocation4] sm:$0xff]
    %v61 = vld [vmem:[#allocation4 + $0x8] sm:$0xff]
    %v62 = vld [vmem:[#allocation4 + $0x10] sm:$0xff]
    %v63 = vld [vmem:[#allocation4 + $0x18] sm:$0xff]
    %v64 = vld [vmem:[#allocation4 + $0x20] sm:$0xff]
    %v65 = vld [vmem:[#allocation4 + $0x28] sm:$0xff]
    %v66 = vld [vmem:[#allocation4 + $0x30] sm:$0xff]
    %v67 = vld [vmem:[#allocation4 + $0x38] sm:$0xff]
    %v68 = vld [vmem:[#allocation4 + $0x40] sm:$0xff]
    %v69 = vld [vmem:[#allocation4 + $0x48] sm:$0xff]
    %v70 = vld [vmem:[#allocation4 + $0x50] sm:$0xff]
    %v71 = vld [vmem:[#allocation4 + $0x58] sm:$0xff]
    %v72 = vld [vmem:[#allocation4 + $0x60] sm:$0xff]
    %v73 = vld [vmem:[#allocation4 + $0x68] sm:$0xff]
    %v74 = vld [vmem:[#allocation4 + $0x70] sm:$0xff]
    %v75 = vld [vmem:[#allocation4 + $0x78] sm:$0xff]
    %76 = vmatprep.subr.mxu0 0.0
    %77 = vmatpush1.msra.mxu0 %v60
    %78 = vmatprep.subr.mxu0 0.0
    %79 = vmatpush1.msra.mxu0 %v61
    %80 = vmatprep.subr.mxu0 0.0
    %81 = vmatpush1.msra.mxu0 %v62
    %82 = vmatprep.subr.mxu0 0.0
    %83 = vmatpush1.msra.mxu0 %v63
    %84 = vmatprep.subr.mxu0 0.0
    %85 = vmatpush1.msra.mxu0 %v64
    %86 = vmatprep.subr.mxu0 0.0
    %87 = vmatpush1.msra.mxu0 %v65
    %88 = vmatprep.subr.mxu0 0.0
    %89 = vmatpush1.msra.mxu0 %v66
    %90 = vmatprep.subr.mxu0 0.0
    %91 = vmatpush1.msra.mxu0 %v67
    %92 = vmatprep.subr.mxu0 0.0
    %93 = vmatpush1.msra.mxu0 %v68
    %94 = vmatprep.subr.mxu0 0.0
    %95 = vmatpush1.msra.mxu0 %v69
    %96 = vmatprep.subr.mxu0 0.0
    %97 = vmatpush1.msra.mxu0 %v70
    %98 = vmatprep.subr.mxu0 0.0
    %99 = vmatpush1.msra.mxu0 %v71
    %100 = vmatprep.subr.mxu0 0.0
    %101 = vmatpush1.msra.mxu0 %v72
    %102 = vmatprep.subr.mxu0 0.0
    %103 = vmatpush1.msra.mxu0 %v73
    %104 = vmatprep.subr.mxu0 0.0
    %105 = vmatpush1.msra.mxu0 %v74
    %106 = vmatprep.subr.mxu0 0.0
    %107 = vmatpush1.msra.mxu0 %v75
    %108 = vmatprep.subr.mxu0 0.0
    %109 = vmatpush1.msra.mxu0 0.0
    %110 = vmatprep.subr.mxu0 0.0
    %111 = vmatpush1.msra.mxu0 0.0
    %112 = vmatprep.subr.mxu0 0.0
    %113 = vmatpush1.msra.mxu0 0.0
    %114 = vmatprep.subr.mxu0 0.0
    %115 = vmatpush1.msra.mxu0 0.0
    %116 = vmatprep.subr.mxu0 0.0
    %117 = vmatpush1.msra.mxu0 0.0
    %118 = vmatprep.subr.mxu0 0.0
    %119 = vmatpush1.msra.mxu0 0.0
    %120 = vmatprep.subr.mxu0 0.0
    %121 = vmatpush1.msra.mxu0 0.0
    %122 = vmatprep.subr.mxu0 0.0
    %123 = vmatpush1.msra.mxu0 0.0
    %124 = vmatprep.subr.mxu0 0.0
    %125 = vmatpush1.msra.mxu0 0.0
    %126 = vmatprep.subr.mxu0 0.0
    %127 = vmatpush1.msra.mxu0 0.0
    %128 = vmatprep.subr.mxu0 0.0
    %129 = vmatpush1.msra.mxu0 0.0
    %130 = vmatprep.subr.mxu0 0.0
    %131 = vmatpush1.msra.mxu0 0.0
    %132 = vmatprep.subr.mxu0 0.0
    %133 = vmatpush1.msra.mxu0 0.0
    %134 = vmatprep.subr.mxu0 0.0
    %135 = vmatpush1.msra.mxu0 0.0
    %136 = vmatprep.subr.mxu0 0.0
    %137 = vmatpush1.msra.mxu0 0.0
    %138 = vmatprep.subr.mxu0 0.0
    %139 = vmatpush1.msra.mxu0 0.0
    %140 = vmatprep.mubr.f32.mxu0 0.0
    %141 = vmatmul.mubr.f32.gmra.mrb[0].mxu0 %v59
    %v142 = vpop.f32.mrb[0].mxu0
    %v143 = vadd.f32 0.0, %v142
    %v144 = vpop.f32.mrb[0].mxu0
    %145 = vdwg.mxu0
    %v146 = vadd.f32 %v58, %v143
    %147 = vst [vmem:[#allocation2] sm:$0xff] %v146
    %v148 = vld [vmem:[#allocation3] sm:$0xff]
    %v149 = vld [vmem:[%s1] sm:$0xff]
    %v150 = vld [vmem:[#allocation7] sm:$0xff]
    %v151 = vld [vmem:[#allocation7 + $0x8] sm:$0xff]
    %v152 = vld [vmem:[#allocation7 + $0x10] sm:$0xff]
    %v153 = vld [vmem:[#allocation7 + $0x18] sm:$0xff]
    %v154 = vld [vmem:[#allocation7 + $0x20] sm:$0xff]
    %v155 = vld [vmem:[#allocation7 + $0x28] sm:$0xff]
    %v156 = vld [vmem:[#allocation7 + $0x30] sm:$0xff]
    %v157 = vld [vmem:[#allocation7 + $0x38] sm:$0xff]
    %v158 = vld [vmem:[#allocation7 + $0x40] sm:$0xff]
    %v159 = vld [vmem:[#allocation7 + $0x48] sm:$0xff]
    %v160 = vld [vmem:[#allocation7 + $0x50] sm:$0xff]
    %v161 = vld [vmem:[#allocation7 + $0x58] sm:$0xff]
    %v162 = vld [vmem:[#allocation7 + $0x60] sm:$0xff]
    %v163 = vld [vmem:[#allocation7 + $0x68] sm:$0xff]
    %v164 = vld [vmem:[#allocation7 + $0x70] sm:$0xff]
    %v165 = vld [vmem:[#allocation7 + $0x78] sm:$0xff]
    %166 = vmatprep.subr.mxu0 0.0
    %167 = vmatpush1.msra.mxu0 %v150
    %168 = vmatprep.subr.mxu0 0.0
    %169 = vmatpush1.msra.mxu0 %v151
    %170 = vmatprep.subr.mxu0 0.0
    %171 = vmatpush1.msra.mxu0 %v152
    %172 = vmatprep.subr.mxu0 0.0
    %173 = vmatpush1.msra.mxu0 %v153
    %174 = vmatprep.subr.mxu0 0.0
    %175 = vmatpush1.msra.mxu0 %v154
    %176 = vmatprep.subr.mxu0 0.0
    %177 = vmatpush1.msra.mxu0 %v155
    %178 = vmatprep.subr.mxu0 0.0
    %179 = vmatpush1.msra.mxu0 %v156
    %180 = vmatprep.subr.mxu0 0.0
    %181 = vmatpush1.msra.mxu0 %v157
    %182 = vmatprep.subr.mxu0 0.0
    %183 = vmatpush1.msra.mxu0 %v158
    %184 = vmatprep.subr.mxu0 0.0
    %185 = vmatpush1.msra.mxu0 %v159
    %186 = vmatprep.subr.mxu0 0.0
    %187 = vmatpush1.msra.mxu0 %v160
    %188 = vmatprep.subr.mxu0 0.0
    %189 = vmatpush1.msra.mxu0 %v161
    %190 = vmatprep.subr.mxu0 0.0
    %191 = vmatpush1.msra.mxu0 %v162
    %192 = vmatprep.subr.mxu0 0.0
    %193 = vmatpush1.msra.mxu0 %v163
    %194 = vmatprep.subr.mxu0 0.0
    %195 = vmatpush1.msra.mxu0 %v164
    %196 = vmatprep.subr.mxu0 0.0
    %197 = vmatpush1.msra.mxu0 %v165
    %198 = vmatprep.subr.mxu0 0.0
    %199 = vmatpush1.msra.mxu0 0.0
    %200 = vmatprep.subr.mxu0 0.0
    %201 = vmatpush1.msra.mxu0 0.0
    %202 = vmatprep.subr.mxu0 0.0
    %203 = vmatpush1.msra.mxu0 0.0
    %204 = vmatprep.subr.mxu0 0.0
    %205 = vmatpush1.msra.mxu0 0.0
    %206 = vmatprep.subr.mxu0 0.0
    %207 = vmatpush1.msra.mxu0 0.0
    %208 = vmatprep.subr.mxu0 0.0
    %209 = vmatpush1.msra.mxu0 0.0
    %210 = vmatprep.subr.mxu0 0.0
    %211 = vmatpush1.msra.mxu0 0.0
    %212 = vmatprep.subr.mxu0 0.0
    %213 = vmatpush1.msra.mxu0 0.0
    %214 = vmatprep.subr.mxu0 0.0
    %215 = vmatpush1.msra.mxu0 0.0
    %216 = vmatprep.subr.mxu0 0.0
    %217 = vmatpush1.msra.mxu0 0.0
    %218 = vmatprep.subr.mxu0 0.0
    %219 = vmatpush1.msra.mxu0 0.0
    %220 = vmatprep.subr.mxu0 0.0
    %221 = vmatpush1.msra.mxu0 0.0
    %222 = vmatprep.subr.mxu0 0.0
    %223 = vmatpush1.msra.mxu0 0.0
    %224 = vmatprep.subr.mxu0 0.0
    %225 = vmatpush1.msra.mxu0 0.0
    %226 = vmatprep.subr.mxu0 0.0
    %227 = vmatpush1.msra.mxu0 0.0
    %228 = vmatprep.subr.mxu0 0.0
    %229 = vmatpush1.msra.mxu0 0.0
    %230 = vmatprep.mubr.f32.mxu0 0.0
    %231 = vmatmul.mubr.f32.gmra.mrb[0].mxu0 %v149
    %v232 = vpop.f32.mrb[0].mxu0
    %v233 = vadd.f32 0.0, %v232
    %v234 = vpop.f32.mrb[0].mxu0
    %235 = vdwg.mxu0
    %v236 = vadd.f32 %v148, %v233
    %237 = vst [vmem:[#allocation3] sm:$0xff] %v236
    // Predicated region
    $region38: #{noisy_linear_fwd.1} parent=1 // pred_check
      %p238 = pneg %p52
    $region39: #{noisy_linear_fwd.1} parent=1 // pred_check_branch
      %240 = sbr.rel (%p238) target = $region41
    $region40: #{noisy_linear_fwd.1} parent=1 // pred_region
      %v241 = vld [vmem:[#allocation2] sm:$0xff]
      %v242 = vld [vmem:[%s4] sm:$0x1]
      %v243 = vld [vmem:[#allocation3] sm:$0xff]
      %v245 = vlaneseq
      %v246 = vshrl.u32 %v245, 7
      %v247 = vsub.s32 0, %v246
      %v248 = vrot.slane %v242, %v247
      %v250 = vmul.f32 %v248, %v243
      %v251 = vadd.f32 %v241, %v250
      %v252 = vld [vmem:[%s5] sm:$0x1]
      %v254 = vlaneseq
      %v255 = vshrl.u32 %v254, 7
      %v256 = vsub.s32 0, %v255
      %v257 = vrot.slane %v252, %v256
      %v259 = vadd.f32 %v251, %v257
      %260 = vst [vmem:[#allocation9] sm:$0xff] %v259
    $region41: #{noisy_linear_fwd.1} parent=1 // pred_fallthru
      _
    // Predicated region
    $region42: #{noisy_linear_fwd.1} parent=1 // pred_check
      _
    $region43: #{noisy_linear_fwd.1} parent=1 // pred_check_branch
      %262 = sbr.rel (0) target = $region45
    $region44: #{noisy_linear_fwd.1} parent=1 // pred_region
      %s264 = ssub.s32 128, 128
      %265 = vsyncadd [#allocation6], %s264
      %s267 = sshll.u32 [#allocation9], 4
      %s268 = int_to_ptr.vmem [resolvable:$true] %s267
      %270 = dma.vmem_to_hbm [thread:$0]  %s268, 128, %s6, [#allocation6]
    $region45: #{noisy_linear_fwd.1} parent=1 // pred_fallthru
      _
    // Predicated region
    $region46: #{noisy_linear_fwd.1} parent=1 // pred_check
      _
    $region47: #{noisy_linear_fwd.1} parent=1 // pred_check_branch
      %272 = sbr.rel (0) target = $region49
    $region48: #{noisy_linear_fwd.1} parent=1 // pred_region
      %273 = dma.done [#allocation6], 128
    $region49: #{noisy_linear_fwd.1} parent=1 // pred_fallthru
      _
    %274 = vsyncpa [#allocation5], 1
    %275 = vsyncpa [#allocation8], 1
    %276 = vsyncpa [#allocation6], 1

</llo_original>
